<compile_context>
chip_gen: v7x
topology: tpu7x:2x2x1
jax: 0.10.0
libtpu: 0.0.40
codegen_flags: <defaults>
</compile_context>

<pallas_src>
import jax
import jax.numpy as jnp
from jax.experimental import pallas as pl
from jax.experimental.pallas import tpu as pltpu

AVOID_ADD = 0.001

_LANE = 128
_VMEM_TILE_BUDGET = 8 << 20   # double-buffered tile budget (bytes), safe on all chips


def _round_up(x, m):
    return ((x + m - 1) // m) * m


def _texture_pow_kernel(tex_ref, w_ref, out_ref):
    # tex_ref : (1,  BP) texture pixel tile (strictly > 0), broadcast over channels
    # w_ref   : (BC, BP) weight tile for the current channel block
    # out_ref : (BC, BP)
    # texture ** w == exp(w * log(texture)). log touches one sublane row only;
    # the per-element work is one EUP transcendental + one VPU mul + sub.
    log_t = jnp.log(tex_ref[...])                       # (1, BP)
    out_ref[...] = jnp.exp(w_ref[...] * log_t) - AVOID_ADD


def _choose_tiling(C, P):
    """Pick (BC, BP): lane-dense, VMEM-budgeted tile sizes."""
    P128 = _round_up(P, _LANE)

    def max_bp(bc):
        # f32, double-buffered: texture row (1) + weight (bc) + out (bc) per lane.
        per_lane_bytes = 4 * 2 * (1 + 2 * bc)
        return (_VMEM_TILE_BUDGET // per_lane_bytes) // _LANE * _LANE

    if max_bp(C) >= _LANE:
        # Whole channel dim in one block: block dim equals full array dim, so
        # no sublane-divisibility constraint and no channel grid axis work.
        BC = C
    else:
        BC = 8
        while BC * 2 < C and max_bp(BC * 2) >= _LANE:
            BC *= 2
    BP = min(P128, max_bp(BC))
    return BC, BP


def texture_learn_forward(texture, weight):
    """texture: (1, Ht, Wt) float32 in (0, 1]; weight: (C, Ht, Wt) float32.

    Returns texture ** weight - AVOID_ADD, shape (C, Ht, Wt).
    """
    C, Ht, Wt = weight.shape
    assert texture.shape == (1, Ht, Wt)
    P = Ht * Wt

    tex2 = texture.astype(jnp.float32).reshape(1, P)    # contiguous reshape: free
    w2 = weight.reshape(C, P)

    BC, BP = _choose_tiling(C, P)

    # Pixels outer (slow), channels inner (fast): the texture block index only
    # depends on the outer axis, so it is fetched once per pixel tile.
    grid = (pl.cdiv(P, BP), pl.cdiv(C, BC))

    out = pl.pallas_call(
        _texture_pow_kernel,
        out_shape=jax.ShapeDtypeStruct((C, P), weight.dtype),
        grid_spec=pltpu.PrefetchScalarGridSpec(
            num_scalar_prefetch=0,
            grid=grid,
            in_specs=[
                pl.BlockSpec((1, BP), lambda p, c: (0, p)),    # texture (broadcast)
                pl.BlockSpec((BC, BP), lambda p, c: (c, p)),   # weight
            ],
            out_specs=pl.BlockSpec((BC, BP), lambda p, c: (c, p)),
        ),
        compiler_params=pltpu.CompilerParams(
            dimension_semantics=("parallel", "parallel"),
        ),
    )(tex2, w2)

    return out.reshape(C, Ht, Wt)


if __name__ == "__main__":
    # Small shapes consistent with the module: target is (C, H, W),
    # texture is the grayscale image resized to (H, W) -> tensor (1, H, W).
    C, Ht, Wt = 4, 16, 16

    key = jax.random.PRNGKey(0)
    k_tex, k_w = jax.random.split(key)

    # Texture values as ToTensor() would give: in (0, 1]; keep strictly > 0.
    texture = jax.random.uniform(
        k_tex, (1, Ht, Wt), dtype=jnp.float32, minval=0.05, maxval=1.0
    )
    # weight = abs(randn_like(logTar)), shape (C, H, W)
    weight = jnp.abs(jax.random.normal(k_w, (C, Ht, Wt), dtype=jnp.float32))

    out = texture_learn_forward(texture, weight)
    out = jax.block_until_ready(out)

    # Sanity check against plain JAX reference (true module semantics).
    ref = jnp.power(texture, weight) - AVOID_ADD
    assert out.shape == (C, Ht, Wt)
    assert jnp.allclose(out, ref, atol=1e-5, rtol=1e-4), float(
        jnp.max(jnp.abs(out - ref))
    )

    print("KERNEL_OK")
</pallas_src>

<mosaic_0001>
module attributes {stable_mosaic.version = 11 : i64} {
  func.func @_texture_pow_kernel(%arg0: i32, %arg1: i32, %arg2: memref<1x256xf32, #tpu.memory_space<vmem>>, %arg3: memref<4x256xf32, #tpu.memory_space<vmem>>, %arg4: memref<4x256xf32, #tpu.memory_space<vmem>>) attributes {dimension_semantics = [#tpu.dimension_semantics<parallel>, #tpu.dimension_semantics<parallel>], iteration_bounds = array<i64: 1, 1>, scalar_prefetch = 0 : i64, scratch_operands = 0 : i64, tpu.core_type = #tpu.core_type<tc>, window_params = [{transform_indices = @transform_0, window_bounds = array<i64: 1, 256>}, {transform_indices = @transform_1, window_bounds = array<i64: 4, 256>}, {transform_indices = @transform_2, window_bounds = array<i64: 4, 256>}]} {
    %c0 = arith.constant 0 : index
    %c0_0 = arith.constant 0 : index
    %0 = vector.load %arg2[%c0, %c0_0] : memref<1x256xf32, #tpu.memory_space<vmem>>, vector<1x256xf32>
    %1 = math.log %0 : vector<1x256xf32>
    %c0_1 = arith.constant 0 : index
    %c0_2 = arith.constant 0 : index
    %2 = vector.load %arg3[%c0_1, %c0_2] : memref<4x256xf32, #tpu.memory_space<vmem>>, vector<4x256xf32>
    %3 = vector.broadcast %1 : vector<1x256xf32> to vector<4x256xf32>
    %4 = arith.mulf %2, %3 : vector<4x256xf32>
    %5 = math.exp %4 : vector<4x256xf32>
    %cst = arith.constant 1.000000e-03 : f32
    %6 = vector.broadcast %cst : f32 to vector<4x256xf32>
    %7 = arith.subf %5, %6 : vector<4x256xf32>
    %c0_3 = arith.constant 0 : index
    %c0_4 = arith.constant 0 : index
    %8 = vector.load %arg4[%c0_3, %c0_4] : memref<4x256xf32, #tpu.memory_space<vmem>>, vector<4x256xf32>
    tpu.vector_store %arg4[%c0_3, %c0_4], %7 {strides = array<i32>} : memref<4x256xf32, #tpu.memory_space<vmem>>, vector<4x256xf32>,
    return
  }
  func.func @transform_0(%arg0: i32, %arg1: i32) -> (i32, i32) {
    %c0_i32 = arith.constant 0 : i32
    %c0_i32_0 = arith.constant 0 : i32
    return %c0_i32, %arg0 : i32, i32
  }
  func.func @transform_1(%arg0: i32, %arg1: i32) -> (i32, i32) {
    %c0_i32 = arith.constant 0 : i32
    return %arg1, %arg0 : i32, i32
  }
  func.func @transform_2(%arg0: i32, %arg1: i32) -> (i32, i32) {
    %c0_i32 = arith.constant 0 : i32
    return %arg1, %arg0 : i32, i32
  }
}

</mosaic_0001>

<llo_original>
// kernel: tpu_custom_call.1
$region0: #{tpu_custom_call.1}
  #allocation0 [shape = 'u32[]', space=smem, size = 0x4, offset = 0x4, fixed_abs, tag = 'smem constant byte address 0x4 - core index']
  #allocation1 [shape = 'u32[144,128]{1,0:T(1,128)}', space=vmem, size = 0x12000, scoped, tag = 'internal scratch']
  %s0 = inlined_call_operand.hbm [shape: f32[1,256], index: 0, kind: input, shape index: {}]
  %s1 = inlined_call_operand.hbm [shape: f32[4,256], index: 1, kind: input, shape index: {}]
  %s2 = inlined_call_operand.hbm [shape: f32[4,256], index: 2, kind: output, shape index: {}]
  %s3 = sld [smem:[#allocation0]]
  $region26: #{tpu_custom_call.1} parent=0
    _
  %s5 = ssub.s32 1, %s3
  %s6 = scalar_select 0, %s5, %s3
  $region1: #{tpu_custom_call.1} parent=0
    #allocation2 [shape = 'u8[1024]{0}', space=vmem, size = 0x400, scoped, tag = 'input window, operand 0, single buffered']
    #allocation3 [shape = 's32[1]{0}', space=sflag, size = 0x4, scoped, tag = 'scoped memory for tpu_custom_call.1']
    #allocation4 [shape = 's32[1]{0}', space=sflag, size = 0x4, scoped, tag = 'scoped memory for tpu_custom_call.1']
    #allocation5 [shape = 'u8[4096]{0}', space=vmem, size = 0x1000, scoped, tag = 'input window, operand 1, single buffered']
    #allocation6 [shape = 's32[1]{0}', space=sflag, size = 0x4, scoped, tag = 'scoped memory for tpu_custom_call.1']
    #allocation7 [shape = 'u8[4096]{0}', space=vmem, size = 0x1000, scoped, tag = 'output window, operand 0, single buffered']
    %7 = vsyncpa [#allocation3], 0
    %8 = vsyncpa [#allocation6], 0
    %9 = vsyncpa [#allocation4], 0
    // Predicated region
    $region2: #{tpu_custom_call.1} parent=1 // pred_check
      _
    $region3: #{tpu_custom_call.1} parent=1 // pred_check_branch
      %11 = sbr.rel (0) target = $region5
    $region4: #{tpu_custom_call.1} parent=1 // pred_region
      %s13 = ssub.s32 32, 32
      %14 = vsyncadd [#allocation3], %s13
      %s16 = sshll.u32 [#allocation2], 4
      %s17 = int_to_ptr.vmem [resolvable:$true] %s16
      %19 = dma.hbm_to_vmem [thread:$0]  %s0, 32, %s17, [#allocation3]
    $region5: #{tpu_custom_call.1} parent=1 // pred_fallthru
      _
    // Predicated region
    $region6: #{tpu_custom_call.1} parent=1 // pred_check
      _
    $region7: #{tpu_custom_call.1} parent=1 // pred_check_branch
      %21 = sbr.rel (0) target = $region9
    $region8: #{tpu_custom_call.1} parent=1 // pred_region
      %s23 = ssub.s32 128, 128
      %24 = vsyncadd [#allocation6], %s23
      %s26 = sshll.u32 [#allocation5], 4
      %s27 = int_to_ptr.vmem [resolvable:$true] %s26
      %29 = dma.hbm_to_vmem [thread:$0]  %s1, 128, %s27, [#allocation6]
    $region9: #{tpu_custom_call.1} parent=1 // pred_fallthru
      _
    // Predicated region
    $region10: #{tpu_custom_call.1} parent=1 // pred_check
      _
    $region11: #{tpu_custom_call.1} parent=1 // pred_check_branch
      %31 = sbr.rel (0) target = $region13
    $region12: #{tpu_custom_call.1} parent=1 // pred_region
      %32 = dma.done [#allocation3], 32
    $region13: #{tpu_custom_call.1} parent=1 // pred_fallthru
      _
    // Predicated region
    $region14: #{tpu_custom_call.1} parent=1 // pred_check
      _
    $region15: #{tpu_custom_call.1} parent=1 // pred_check_branch
      %34 = sbr.rel (0) target = $region17
    $region16: #{tpu_custom_call.1} parent=1 // pred_region
      %35 = dma.done [#allocation6], 128
    $region17: #{tpu_custom_call.1} parent=1 // pred_fallthru
      _
    %v36 = vld [vmem:[#allocation2] sm:$0x3]
    %v37 = vlog2.pop %v36
    %v38 = vmul.f32 %v37, 0.6931472
    %v39 = vld [vmem:[#allocation5] sm:$0xff]
    %v41 = vlaneseq
    %v42 = vshrl.u32 %v41, 7
    %v43 = vsub.s32 0, %v42
    %v44 = vrot.slane %v38, %v43
    %v45 = vlaneseq
    %v46 = vshrl.u32 %v45, 7
    %v47 = vsub.s32 1, %v46
    %v48 = vrot.slane %v38, %v47
    %v49 = vcombine.low %v44, %v48
    %v51 = vmul.f32 %v39, %v49
    %v52 = vmul.f32 %v51, 1.442695
    %v53 = vpow.pop %v52
    %v54 = vsub.f32 %v53, 0.001
    %55 = vst [vmem:[#allocation7] sm:$0xff] %v54
    // Predicated region
    $region18: #{tpu_custom_call.1} parent=1 // pred_check
      _
    $region19: #{tpu_custom_call.1} parent=1 // pred_check_branch
      %57 = sbr.rel (0) target = $region21
    $region20: #{tpu_custom_call.1} parent=1 // pred_region
      %s59 = ssub.s32 128, 128
      %60 = vsyncadd [#allocation4], %s59
      %s62 = sshll.u32 [#allocation7], 4
      %s63 = int_to_ptr.vmem [resolvable:$true] %s62
      %65 = dma.vmem_to_hbm [thread:$0]  %s63, 128, %s2, [#allocation4]
    $region21: #{tpu_custom_call.1} parent=1 // pred_fallthru
      _
    // Predicated region
    $region22: #{tpu_custom_call.1} parent=1 // pred_check
      _
    $region23: #{tpu_custom_call.1} parent=1 // pred_check_branch
      %67 = sbr.rel (0) target = $region25
    $region24: #{tpu_custom_call.1} parent=1 // pred_region
      %68 = dma.done [#allocation4], 128
    $region25: #{tpu_custom_call.1} parent=1 // pred_fallthru
      _
    %69 = vsyncpa [#allocation3], 1
    %70 = vsyncpa [#allocation6], 1
    %71 = vsyncpa [#allocation4], 1

</llo_original>
